<compile_context>
chip_gen: v5e
topology: v5e:2x2
jax: 0.10.0
libtpu: 0.0.40
codegen_flags: <defaults>
</compile_context>

<pallas_src>
import functools

import jax
import jax.numpy as jnp
from jax import lax
from jax.experimental import pallas as pl
from jax.experimental.pallas import tpu as pltpu


def _round_up(x, m):
    return ((x + m - 1) // m) * m


def _floordiv_const(p, c):
    """Elementwise p // c for a nonnegative int32 array and Python int c > 0.

    Avoids vector integer division (not a native VPU op): power-of-two
    divisors use a shift; otherwise an f32 reciprocal-multiply estimate is
    fixed up with exact int32 corrections (estimate is within +-2 of the
    true quotient for any realistic H*W*D)."""
    if c == 1:
        return p
    if (c & (c - 1)) == 0:
        return p >> (int(c).bit_length() - 1)
    q = jnp.floor(p.astype(jnp.float32) * jnp.float32(1.0 / c)).astype(jnp.int32)
    for _ in range(2):
        q = jnp.where(q * c > p, q - 1, q)
    for _ in range(2):
        q = jnp.where(p - q * c >= c, q + 1, q)
    return q


def _affine_grid_kernel(theta_ref, out_ref, *, height, width, depth,
                        rows, batch_block):
    """One grid step: `batch_block` batch elements x one (rows, 128) HWD tile.

    theta_ref: SMEM (N_pad * 12,) f32 -- scalar-prefetched affine params.
    out_ref  : VMEM (batch_block, 3, rows, 128) f32 -- lane-dense output tile.
    """
    b = pl.program_id(0)
    t = pl.program_id(1)

    # Flattened point index p = (h * W + w) * D + d, synthesized on the VPU.
    row = lax.broadcasted_iota(jnp.int32, (rows, 128), 0)
    col = lax.broadcasted_iota(jnp.int32, (rows, 128), 1)
    p = t * (rows * 128) + row * 128 + col

    wd = width * depth
    h = _floordiv_const(p, wd)
    rem = p - h * wd
    w = _floordiv_const(rem, depth)
    d = rem - w * depth

    y = h.astype(jnp.float32) * (2.0 / height) - 1.0
    x = w.astype(jnp.float32) * (2.0 / width) - 1.0
    z = d.astype(jnp.float32) * (2.0 / depth) - 1.0

    for i in range(batch_block):            # static, unrolled
        n = b * batch_block + i
        base = n * 12
        for k in range(3):                  # output channels
            ty = theta_ref[base + 4 * k + 0]
            tx = theta_ref[base + 4 * k + 1]
            tz = theta_ref[base + 4 * k + 2]
            tw = theta_ref[base + 4 * k + 3]
            out_ref[i, k] = ty * y + tx * x + tz * z + tw


def affine_grid_gen(theta, height, width, depth, aux_loss=False):
    """Forward of AffineGridGen. theta: (N, 3, 4) f32 -> (N, H, W, D, 3) f32."""
    theta = theta.astype(jnp.float32)
    n = theta.shape[0]
    hwd = height * width * depth

    # --- tiling choices -----------------------------------------------------
    p_rows = pl.cdiv(hwd, 128)              # 128-lane rows covering HWD
    p_rows_pad = _round_up(p_rows, 8)       # sublane-aligned
    rows = min(1024, p_rows_pad)            # <= 1024*128 pts => 1.5 MiB/block
    p_full = _round_up(p_rows_pad, rows)
    n_hwd_tiles = p_full // rows

    # Amortize per-grid-step overhead when the HWD tile is tiny by blocking
    # several batch elements per step (keeps output block <= ~2 MiB).
    batch_block = 1
    if n_hwd_tiles == 1 and n > 1:
        bytes_per_batch = 3 * rows * 128 * 4
        batch_block = max(1, min(n, (2 << 20) // bytes_per_batch, 16))
    n_pad = _round_up(n, batch_block)

    theta_flat = jnp.pad(theta.reshape(n, 12),
                         ((0, n_pad - n), (0, 0))).reshape(n_pad * 12)

    kernel = functools.partial(
        _affine_grid_kernel, height=height, width=width, depth=depth,
        rows=rows, batch_block=batch_block)

    out_padded = pl.pallas_call(
        kernel,
        out_shape=jax.ShapeDtypeStruct((n_pad, 3, p_full, 128), jnp.float32),
        grid_spec=pltpu.PrefetchScalarGridSpec(
            num_scalar_prefetch=1,                       # theta -> SMEM
            grid=(n_pad // batch_block, n_hwd_tiles),
            in_specs=[],
            out_specs=pl.BlockSpec(
                (batch_block, 3, rows, 128),
                lambda b, t, theta_smem: (b, 0, t, 0)),
        ),
        compiler_params=pltpu.CompilerParams(
            dimension_semantics=("parallel", "parallel")),
    )(theta_flat)

    # --- plain-JAX glue back to the module's channels-last layout -----------
    out_flat = out_padded.reshape(n_pad, 3, p_full * 128)[:n, :, :hwd]
    # NOTE: consumers that accept channels-first (N, 3, H*W*D) can use
    # out_flat directly and skip this transpose (it is an extra HBM round trip
    # of the full output with a 3-wide minor dim).
    out = jnp.transpose(out_flat, (0, 2, 1)).reshape(n, height, width, depth, 3)

    if not aux_loss:
        return out

    # aux-loss branch: tiny (N*3*4) reduction -> plain JAX.
    identity = jnp.array([[1, 0, 0, 0], [0, 1, 0, 0], [0, 0, 1, 0]],
                         dtype=jnp.float32)
    diff = theta - identity[None, :, :]
    loss = jnp.sum(diff * diff).reshape(1, 1)
    return out, loss


# ----------------------------- reference ------------------------------------
def _make_base_grid(height, width, depth):
    ys = -1.0 + 2.0 * jnp.arange(height, dtype=jnp.float32) / height
    xs = -1.0 + 2.0 * jnp.arange(width, dtype=jnp.float32) / width
    zs = -1.0 + 2.0 * jnp.arange(depth, dtype=jnp.float32) / depth
    gy = jnp.broadcast_to(ys[:, None, None], (height, width, depth))
    gx = jnp.broadcast_to(xs[None, :, None], (height, width, depth))
    gz = jnp.broadcast_to(zs[None, None, :], (height, width, depth))
    gw = jnp.ones((height, width, depth), jnp.float32)
    return jnp.stack([gy, gx, gz, gw], axis=0).reshape(4, height * width * depth)


def _reference(theta, height, width, depth):
    grid = _make_base_grid(height, width, depth)        # (4, HWD)
    batchgrid = jnp.transpose(grid, (1, 0))             # (HWD, 4)
    out = jnp.einsum("pj,nkj->npk", batchgrid, theta)   # (N, HWD, 3)
    return out.reshape(theta.shape[0], height, width, depth, 3)


if __name__ == "__main__":
    H, W, D = 8, 8, 8      # HWD = 512
    N = 2
    key = jax.random.PRNGKey(0)
    identity = jnp.array([[1, 0, 0, 0], [0, 1, 0, 0], [0, 0, 1, 0]],
                         dtype=jnp.float32)
    theta = identity[None] + 0.1 * jax.random.normal(key, (N, 3, 4),
                                                     dtype=jnp.float32)

    out = affine_grid_gen(theta, H, W, D, aux_loss=False)
    out = jax.block_until_ready(out)

    ref = _reference(theta, H, W, D)
    assert out.shape == (N, H, W, D, 3), out.shape
    assert out.dtype == jnp.float32
    assert float(jnp.max(jnp.abs(out - ref))) < 1e-5

    # Non-power-of-two spatial dims exercise the float-reciprocal index path.
    H2, W2, D2 = 6, 5, 7
    theta2 = identity[None] + 0.05 * jax.random.normal(
        jax.random.PRNGKey(1), (3, 3, 4), dtype=jnp.float32)
    out2 = jax.block_until_ready(affine_grid_gen(theta2, H2, W2, D2))
    ref2 = _reference(theta2, H2, W2, D2)
    assert float(jnp.max(jnp.abs(out2 - ref2))) < 1e-5

    print("KERNEL_OK")
</pallas_src>

<mosaic_0001>
module attributes {stable_mosaic.version = 11 : i64} {
  func.func @_affine_grid_kernel(%arg0: i32, %arg1: i32, %arg2: memref<24xf32, #tpu.memory_space<smem>>, %arg3: memref<2x3x8x128xf32, #tpu.memory_space<vmem>>) attributes {dimension_semantics = [#tpu.dimension_semantics<parallel>, #tpu.dimension_semantics<parallel>], iteration_bounds = array<i64: 1, 1>, scalar_prefetch = 1 : i64, scratch_operands = 0 : i64, tpu.core_type = #tpu.core_type<tc>, window_params = [{transform_indices = @transform_0, window_bounds = array<i64: 2, 3, 8, 128>}]} {
    %0 = tpu.iota {dimensions = array<i32: 0>} : vector<8x128xi32>
    %1 = tpu.iota {dimensions = array<i32: 1>} : vector<8x128xi32>
    %c1024_i32 = arith.constant 1024 : i32
    %2 = arith.muli %arg1, %c1024_i32 : i32
    %c128_i32 = arith.constant 128 : i32
    %3 = vector.broadcast %c128_i32 : i32 to vector<8x128xi32>
    %4 = arith.muli %0, %3 : vector<8x128xi32>
    %5 = vector.broadcast %2 : i32 to vector<8x128xi32>
    %6 = arith.addi %5, %4 : vector<8x128xi32>
    %7 = arith.addi %6, %1 : vector<8x128xi32>
    %c6_i32 = arith.constant 6 : i32
    %8 = vector.broadcast %c6_i32 : i32 to vector<8x128xi32>
    %9 = arith.shrsi %7, %8 : vector<8x128xi32>
    %c64_i32 = arith.constant 64 : i32
    %10 = vector.broadcast %c64_i32 : i32 to vector<8x128xi32>
    %11 = arith.muli %9, %10 : vector<8x128xi32>
    %12 = arith.subi %7, %11 : vector<8x128xi32>
    %c3_i32 = arith.constant 3 : i32
    %13 = vector.broadcast %c3_i32 : i32 to vector<8x128xi32>
    %14 = arith.shrsi %12, %13 : vector<8x128xi32>
    %c8_i32 = arith.constant 8 : i32
    %15 = vector.broadcast %c8_i32 : i32 to vector<8x128xi32>
    %16 = arith.muli %14, %15 : vector<8x128xi32>
    %17 = arith.subi %12, %16 : vector<8x128xi32>
    %18 = arith.sitofp %9 : vector<8x128xi32> to vector<8x128xf32>
    %cst = arith.constant 2.500000e-01 : f32
    %19 = vector.broadcast %cst : f32 to vector<8x128xf32>
    %20 = arith.mulf %18, %19 : vector<8x128xf32>
    %cst_0 = arith.constant 1.000000e+00 : f32
    %21 = vector.broadcast %cst_0 : f32 to vector<8x128xf32>
    %22 = arith.subf %20, %21 : vector<8x128xf32>
    %23 = arith.sitofp %14 : vector<8x128xi32> to vector<8x128xf32>
    %cst_1 = arith.constant 2.500000e-01 : f32
    %24 = vector.broadcast %cst_1 : f32 to vector<8x128xf32>
    %25 = arith.mulf %23, %24 : vector<8x128xf32>
    %cst_2 = arith.constant 1.000000e+00 : f32
    %26 = vector.broadcast %cst_2 : f32 to vector<8x128xf32>
    %27 = arith.subf %25, %26 : vector<8x128xf32>
    %28 = arith.sitofp %17 : vector<8x128xi32> to vector<8x128xf32>
    %cst_3 = arith.constant 2.500000e-01 : f32
    %29 = vector.broadcast %cst_3 : f32 to vector<8x128xf32>
    %30 = arith.mulf %28, %29 : vector<8x128xf32>
    %cst_4 = arith.constant 1.000000e+00 : f32
    %31 = vector.broadcast %cst_4 : f32 to vector<8x128xf32>
    %32 = arith.subf %30, %31 : vector<8x128xf32>
    %c2_i32 = arith.constant 2 : i32
    %33 = arith.muli %arg0, %c2_i32 : i32
    %c0_i32 = arith.constant 0 : i32
    %34 = arith.addi %33, %c0_i32 : i32
    %c12_i32 = arith.constant 12 : i32
    %35 = arith.muli %34, %c12_i32 : i32
    %c0_i32_5 = arith.constant 0 : i32
    %36 = arith.addi %35, %c0_i32_5 : i32
    %c0_i32_6 = arith.constant 0 : i32
    %37 = arith.addi %36, %c0_i32_6 : i32
    %38 = arith.index_cast %37 : i32 to index
    %39 = memref.load %arg2[%38] : memref<24xf32, #tpu.memory_space<smem>>
    %c0_i32_7 = arith.constant 0 : i32
    %40 = arith.addi %35, %c0_i32_7 : i32
    %c1_i32 = arith.constant 1 : i32
    %41 = arith.addi %40, %c1_i32 : i32
    %42 = arith.index_cast %41 : i32 to index
    %43 = memref.load %arg2[%42] : memref<24xf32, #tpu.memory_space<smem>>
    %c0_i32_8 = arith.constant 0 : i32
    %44 = arith.addi %35, %c0_i32_8 : i32
    %c2_i32_9 = arith.constant 2 : i32
    %45 = arith.addi %44, %c2_i32_9 : i32
    %46 = arith.index_cast %45 : i32 to index
    %47 = memref.load %arg2[%46] : memref<24xf32, #tpu.memory_space<smem>>
    %c0_i32_10 = arith.constant 0 : i32
    %48 = arith.addi %35, %c0_i32_10 : i32
    %c3_i32_11 = arith.constant 3 : i32
    %49 = arith.addi %48, %c3_i32_11 : i32
    %50 = arith.index_cast %49 : i32 to index
    %51 = memref.load %arg2[%50] : memref<24xf32, #tpu.memory_space<smem>>
    %52 = vector.broadcast %39 : f32 to vector<8x128xf32>
    %53 = arith.mulf %52, %22 : vector<8x128xf32>
    %54 = vector.broadcast %43 : f32 to vector<8x128xf32>
    %55 = arith.mulf %54, %27 : vector<8x128xf32>
    %56 = arith.addf %53, %55 : vector<8x128xf32>
    %57 = vector.broadcast %47 : f32 to vector<8x128xf32>
    %58 = arith.mulf %57, %32 : vector<8x128xf32>
    %59 = arith.addf %56, %58 : vector<8x128xf32>
    %60 = vector.broadcast %51 : f32 to vector<8x128xf32>
    %61 = arith.addf %59, %60 : vector<8x128xf32>
    %c0 = arith.constant 0 : index
    %c0_12 = arith.constant 0 : index
    %c0_13 = arith.constant 0 : index
    %c0_14 = arith.constant 0 : index
    %62 = vector.load %arg3[%c0, %c0_12, %c0_13, %c0_14] : memref<2x3x8x128xf32, #tpu.memory_space<vmem>>, vector<1x1x8x128xf32>
    %63 = vector.shape_cast %62 : vector<1x1x8x128xf32> to vector<8x128xf32>
    %64 = vector.shape_cast %61 : vector<8x128xf32> to vector<1x1x8x128xf32>
    tpu.vector_store %arg3[%c0, %c0_12, %c0_13, %c0_14], %64 {strides = array<i32>} : memref<2x3x8x128xf32, #tpu.memory_space<vmem>>, vector<1x1x8x128xf32>,
    %c4_i32 = arith.constant 4 : i32
    %65 = arith.addi %35, %c4_i32 : i32
    %c0_i32_15 = arith.constant 0 : i32
    %66 = arith.addi %65, %c0_i32_15 : i32
    %67 = arith.index_cast %66 : i32 to index
    %68 = memref.load %arg2[%67] : memref<24xf32, #tpu.memory_space<smem>>
    %c4_i32_16 = arith.constant 4 : i32
    %69 = arith.addi %35, %c4_i32_16 : i32
    %c1_i32_17 = arith.constant 1 : i32
    %70 = arith.addi %69, %c1_i32_17 : i32
    %71 = arith.index_cast %70 : i32 to index
    %72 = memref.load %arg2[%71] : memref<24xf32, #tpu.memory_space<smem>>
    %c4_i32_18 = arith.constant 4 : i32
    %73 = arith.addi %35, %c4_i32_18 : i32
    %c2_i32_19 = arith.constant 2 : i32
    %74 = arith.addi %73, %c2_i32_19 : i32
    %75 = arith.index_cast %74 : i32 to index
    %76 = memref.load %arg2[%75] : memref<24xf32, #tpu.memory_space<smem>>
    %c4_i32_20 = arith.constant 4 : i32
    %77 = arith.addi %35, %c4_i32_20 : i32
    %c3_i32_21 = arith.constant 3 : i32
    %78 = arith.addi %77, %c3_i32_21 : i32
    %79 = arith.index_cast %78 : i32 to index
    %80 = memref.load %arg2[%79] : memref<24xf32, #tpu.memory_space<smem>>
    %81 = vector.broadcast %68 : f32 to vector<8x128xf32>
    %82 = arith.mulf %81, %22 : vector<8x128xf32>
    %83 = vector.broadcast %72 : f32 to vector<8x128xf32>
    %84 = arith.mulf %83, %27 : vector<8x128xf32>
    %85 = arith.addf %82, %84 : vector<8x128xf32>
    %86 = vector.broadcast %76 : f32 to vector<8x128xf32>
    %87 = arith.mulf %86, %32 : vector<8x128xf32>
    %88 = arith.addf %85, %87 : vector<8x128xf32>
    %89 = vector.broadcast %80 : f32 to vector<8x128xf32>
    %90 = arith.addf %88, %89 : vector<8x128xf32>
    %c0_22 = arith.constant 0 : index
    %c1 = arith.constant 1 : index
    %c0_23 = arith.constant 0 : index
    %c0_24 = arith.constant 0 : index
    %91 = vector.load %arg3[%c0_22, %c1, %c0_23, %c0_24] : memref<2x3x8x128xf32, #tpu.memory_space<vmem>>, vector<1x1x8x128xf32>
    %92 = vector.shape_cast %91 : vector<1x1x8x128xf32> to vector<8x128xf32>
    %93 = vector.shape_cast %90 : vector<8x128xf32> to vector<1x1x8x128xf32>
    tpu.vector_store %arg3[%c0_22, %c1, %c0_23, %c0_24], %93 {strides = array<i32>} : memref<2x3x8x128xf32, #tpu.memory_space<vmem>>, vector<1x1x8x128xf32>,
    %c8_i32_25 = arith.constant 8 : i32
    %94 = arith.addi %35, %c8_i32_25 : i32
    %c0_i32_26 = arith.constant 0 : i32
    %95 = arith.addi %94, %c0_i32_26 : i32
    %96 = arith.index_cast %95 : i32 to index
    %97 = memref.load %arg2[%96] : memref<24xf32, #tpu.memory_space<smem>>
    %c8_i32_27 = arith.constant 8 : i32
    %98 = arith.addi %35, %c8_i32_27 : i32
    %c1_i32_28 = arith.constant 1 : i32
    %99 = arith.addi %98, %c1_i32_28 : i32
    %100 = arith.index_cast %99 : i32 to index
    %101 = memref.load %arg2[%100] : memref<24xf32, #tpu.memory_space<smem>>
    %c8_i32_29 = arith.constant 8 : i32
    %102 = arith.addi %35, %c8_i32_29 : i32
    %c2_i32_30 = arith.constant 2 : i32
    %103 = arith.addi %102, %c2_i32_30 : i32
    %104 = arith.index_cast %103 : i32 to index
    %105 = memref.load %arg2[%104] : memref<24xf32, #tpu.memory_space<smem>>
    %c8_i32_31 = arith.constant 8 : i32
    %106 = arith.addi %35, %c8_i32_31 : i32
    %c3_i32_32 = arith.constant 3 : i32
    %107 = arith.addi %106, %c3_i32_32 : i32
    %108 = arith.index_cast %107 : i32 to index
    %109 = memref.load %arg2[%108] : memref<24xf32, #tpu.memory_space<smem>>
    %110 = vector.broadcast %97 : f32 to vector<8x128xf32>
    %111 = arith.mulf %110, %22 : vector<8x128xf32>
    %112 = vector.broadcast %101 : f32 to vector<8x128xf32>
    %113 = arith.mulf %112, %27 : vector<8x128xf32>
    %114 = arith.addf %111, %113 : vector<8x128xf32>
    %115 = vector.broadcast %105 : f32 to vector<8x128xf32>
    %116 = arith.mulf %115, %32 : vector<8x128xf32>
    %117 = arith.addf %114, %116 : vector<8x128xf32>
    %118 = vector.broadcast %109 : f32 to vector<8x128xf32>
    %119 = arith.addf %117, %118 : vector<8x128xf32>
    %c0_33 = arith.constant 0 : index
    %c2 = arith.constant 2 : index
    %c0_34 = arith.constant 0 : index
    %c0_35 = arith.constant 0 : index
    %120 = vector.load %arg3[%c0_33, %c2, %c0_34, %c0_35] : memref<2x3x8x128xf32, #tpu.memory_space<vmem>>, vector<1x1x8x128xf32>
    %121 = vector.shape_cast %120 : vector<1x1x8x128xf32> to vector<8x128xf32>
    %122 = vector.shape_cast %119 : vector<8x128xf32> to vector<1x1x8x128xf32>
    tpu.vector_store %arg3[%c0_33, %c2, %c0_34, %c0_35], %122 {strides = array<i32>} : memref<2x3x8x128xf32, #tpu.memory_space<vmem>>, vector<1x1x8x128xf32>,
    %c2_i32_36 = arith.constant 2 : i32
    %123 = arith.muli %arg0, %c2_i32_36 : i32
    %c1_i32_37 = arith.constant 1 : i32
    %124 = arith.addi %123, %c1_i32_37 : i32
    %c12_i32_38 = arith.constant 12 : i32
    %125 = arith.muli %124, %c12_i32_38 : i32
    %c0_i32_39 = arith.constant 0 : i32
    %126 = arith.addi %125, %c0_i32_39 : i32
    %c0_i32_40 = arith.constant 0 : i32
    %127 = arith.addi %126, %c0_i32_40 : i32
    %128 = arith.index_cast %127 : i32 to index
    %129 = memref.load %arg2[%128] : memref<24xf32, #tpu.memory_space<smem>>
    %c0_i32_41 = arith.constant 0 : i32
    %130 = arith.addi %125, %c0_i32_41 : i32
    %c1_i32_42 = arith.constant 1 : i32
    %131 = arith.addi %130, %c1_i32_42 : i32
    %132 = arith.index_cast %131 : i32 to index
    %133 = memref.load %arg2[%132] : memref<24xf32, #tpu.memory_space<smem>>
    %c0_i32_43 = arith.constant 0 : i32
    %134 = arith.addi %125, %c0_i32_43 : i32
    %c2_i32_44 = arith.constant 2 : i32
    %135 = arith.addi %134, %c2_i32_44 : i32
    %136 = arith.index_cast %135 : i32 to index
    %137 = memref.load %arg2[%136] : memref<24xf32, #tpu.memory_space<smem>>
    %c0_i32_45 = arith.constant 0 : i32
    %138 = arith.addi %125, %c0_i32_45 : i32
    %c3_i32_46 = arith.constant 3 : i32
    %139 = arith.addi %138, %c3_i32_46 : i32
    %140 = arith.index_cast %139 : i32 to index
    %141 = memref.load %arg2[%140] : memref<24xf32, #tpu.memory_space<smem>>
    %142 = vector.broadcast %129 : f32 to vector<8x128xf32>
    %143 = arith.mulf %142, %22 : vector<8x128xf32>
    %144 = vector.broadcast %133 : f32 to vector<8x128xf32>
    %145 = arith.mulf %144, %27 : vector<8x128xf32>
    %146 = arith.addf %143, %145 : vector<8x128xf32>
    %147 = vector.broadcast %137 : f32 to vector<8x128xf32>
    %148 = arith.mulf %147, %32 : vector<8x128xf32>
    %149 = arith.addf %146, %148 : vector<8x128xf32>
    %150 = vector.broadcast %141 : f32 to vector<8x128xf32>
    %151 = arith.addf %149, %150 : vector<8x128xf32>
    %c1_47 = arith.constant 1 : index
    %c0_48 = arith.constant 0 : index
    %c0_49 = arith.constant 0 : index
    %c0_50 = arith.constant 0 : index
    %152 = vector.load %arg3[%c1_47, %c0_48, %c0_49, %c0_50] : memref<2x3x8x128xf32, #tpu.memory_space<vmem>>, vector<1x1x8x128xf32>
    %153 = vector.shape_cast %152 : vector<1x1x8x128xf32> to vector<8x128xf32>
    %154 = vector.shape_cast %151 : vector<8x128xf32> to vector<1x1x8x128xf32>
    tpu.vector_store %arg3[%c1_47, %c0_48, %c0_49, %c0_50], %154 {strides = array<i32>} : memref<2x3x8x128xf32, #tpu.memory_space<vmem>>, vector<1x1x8x128xf32>,
    %c4_i32_51 = arith.constant 4 : i32
    %155 = arith.addi %125, %c4_i32_51 : i32
    %c0_i32_52 = arith.constant 0 : i32
    %156 = arith.addi %155, %c0_i32_52 : i32
    %157 = arith.index_cast %156 : i32 to index
    %158 = memref.load %arg2[%157] : memref<24xf32, #tpu.memory_space<smem>>
    %c4_i32_53 = arith.constant 4 : i32
    %159 = arith.addi %125, %c4_i32_53 : i32
    %c1_i32_54 = arith.constant 1 : i32
    %160 = arith.addi %159, %c1_i32_54 : i32
    %161 = arith.index_cast %160 : i32 to index
    %162 = memref.load %arg2[%161] : memref<24xf32, #tpu.memory_space<smem>>
    %c4_i32_55 = arith.constant 4 : i32
    %163 = arith.addi %125, %c4_i32_55 : i32
    %c2_i32_56 = arith.constant 2 : i32
    %164 = arith.addi %163, %c2_i32_56 : i32
    %165 = arith.index_cast %164 : i32 to index
    %166 = memref.load %arg2[%165] : memref<24xf32, #tpu.memory_space<smem>>
    %c4_i32_57 = arith.constant 4 : i32
    %167 = arith.addi %125, %c4_i32_57 : i32
    %c3_i32_58 = arith.constant 3 : i32
    %168 = arith.addi %167, %c3_i32_58 : i32
    %169 = arith.index_cast %168 : i32 to index
    %170 = memref.load %arg2[%169] : memref<24xf32, #tpu.memory_space<smem>>
    %171 = vector.broadcast %158 : f32 to vector<8x128xf32>
    %172 = arith.mulf %171, %22 : vector<8x128xf32>
    %173 = vector.broadcast %162 : f32 to vector<8x128xf32>
    %174 = arith.mulf %173, %27 : vector<8x128xf32>
    %175 = arith.addf %172, %174 : vector<8x128xf32>
    %176 = vector.broadcast %166 : f32 to vector<8x128xf32>
    %177 = arith.mulf %176, %32 : vector<8x128xf32>
    %178 = arith.addf %175, %177 : vector<8x128xf32>
    %179 = vector.broadcast %170 : f32 to vector<8x128xf32>
    %180 = arith.addf %178, %179 : vector<8x128xf32>
    %c1_59 = arith.constant 1 : index
    %c1_60 = arith.constant 1 : index
    %c0_61 = arith.constant 0 : index
    %c0_62 = arith.constant 0 : index
    %181 = vector.load %arg3[%c1_59, %c1_60, %c0_61, %c0_62] : memref<2x3x8x128xf32, #tpu.memory_space<vmem>>, vector<1x1x8x128xf32>
    %182 = vector.shape_cast %181 : vector<1x1x8x128xf32> to vector<8x128xf32>
    %183 = vector.shape_cast %180 : vector<8x128xf32> to vector<1x1x8x128xf32>
    tpu.vector_store %arg3[%c1_59, %c1_60, %c0_61, %c0_62], %183 {strides = array<i32>} : memref<2x3x8x128xf32, #tpu.memory_space<vmem>>, vector<1x1x8x128xf32>,
    %c8_i32_63 = arith.constant 8 : i32
    %184 = arith.addi %125, %c8_i32_63 : i32
    %c0_i32_64 = arith.constant 0 : i32
    %185 = arith.addi %184, %c0_i32_64 : i32
    %186 = arith.index_cast %185 : i32 to index
    %187 = memref.load %arg2[%186] : memref<24xf32, #tpu.memory_space<smem>>
    %c8_i32_65 = arith.constant 8 : i32
    %188 = arith.addi %125, %c8_i32_65 : i32
    %c1_i32_66 = arith.constant 1 : i32
    %189 = arith.addi %188, %c1_i32_66 : i32
    %190 = arith.index_cast %189 : i32 to index
    %191 = memref.load %arg2[%190] : memref<24xf32, #tpu.memory_space<smem>>
    %c8_i32_67 = arith.constant 8 : i32
    %192 = arith.addi %125, %c8_i32_67 : i32
    %c2_i32_68 = arith.constant 2 : i32
    %193 = arith.addi %192, %c2_i32_68 : i32
    %194 = arith.index_cast %193 : i32 to index
    %195 = memref.load %arg2[%194] : memref<24xf32, #tpu.memory_space<smem>>
    %c8_i32_69 = arith.constant 8 : i32
    %196 = arith.addi %125, %c8_i32_69 : i32
    %c3_i32_70 = arith.constant 3 : i32
    %197 = arith.addi %196, %c3_i32_70 : i32
    %198 = arith.index_cast %197 : i32 to index
    %199 = memref.load %arg2[%198] : memref<24xf32, #tpu.memory_space<smem>>
    %200 = vector.broadcast %187 : f32 to vector<8x128xf32>
    %201 = arith.mulf %200, %22 : vector<8x128xf32>
    %202 = vector.broadcast %191 : f32 to vector<8x128xf32>
    %203 = arith.mulf %202, %27 : vector<8x128xf32>
    %204 = arith.addf %201, %203 : vector<8x128xf32>
    %205 = vector.broadcast %195 : f32 to vector<8x128xf32>
    %206 = arith.mulf %205, %32 : vector<8x128xf32>
    %207 = arith.addf %204, %206 : vector<8x128xf32>
    %208 = vector.broadcast %199 : f32 to vector<8x128xf32>
    %209 = arith.addf %207, %208 : vector<8x128xf32>
    %c1_71 = arith.constant 1 : index
    %c2_72 = arith.constant 2 : index
    %c0_73 = arith.constant 0 : index
    %c0_74 = arith.constant 0 : index
    %210 = vector.load %arg3[%c1_71, %c2_72, %c0_73, %c0_74] : memref<2x3x8x128xf32, #tpu.memory_space<vmem>>, vector<1x1x8x128xf32>
    %211 = vector.shape_cast %210 : vector<1x1x8x128xf32> to vector<8x128xf32>
    %212 = vector.shape_cast %209 : vector<8x128xf32> to vector<1x1x8x128xf32>
    tpu.vector_store %arg3[%c1_71, %c2_72, %c0_73, %c0_74], %212 {strides = array<i32>} : memref<2x3x8x128xf32, #tpu.memory_space<vmem>>, vector<1x1x8x128xf32>,
    return
  }
  func.func @transform_0(%arg0: i32, %arg1: i32, %arg2: memref<24xf32, #tpu.memory_space<smem>>) -> (i32, i32, i32, i32) {
    %c0_i32 = arith.constant 0 : i32
    %c0_i32_0 = arith.constant 0 : i32
    %c0_i32_1 = arith.constant 0 : i32
    return %arg0, %c0_i32, %arg1, %c0_i32_0 : i32, i32, i32, i32
  }
}

</mosaic_0001>

<llo_original>
// kernel: tpu_custom_call.1
$region0: #{tpu_custom_call.1}
  #allocation0 [shape = 'u32[]', space=smem, size = 0x4, offset = 0x4, fixed_abs, tag = 'smem constant byte address 0x4 - core index']
  #allocation1 [shape = 'u32[72,128]{1,0:T(1,128)}', space=vmem, size = 0x9000, scoped, tag = 'internal scratch']
  #allocation2 [shape = 's32[1]{0}', space=sflag, size = 0x4, scoped, tag = 'scoped memory for tpu_custom_call.1']
  #allocation3 [shape = 'u8[512]{0}', space=smem, size = 0x200, scoped, tag = 'prefetched SMEM operand 0']
  %s0 = inlined_call_operand.hbm [shape: f32[24], index: 0, kind: input, shape index: {}]
  %s1 = inlined_call_operand.hbm [shape: f32[2,3,8,128], index: 1, kind: output, shape index: {}]
  %s2 = sld [smem:[#allocation0]]
  $region10: #{tpu_custom_call.1} parent=0
    _
  %s4 = ssub.s32 1, %s2
  %s5 = scalar_select 0, %s4, %s2
  %s7 = sshll.u32 %s0, 4
  %s8 = int_to_ptr.hbm [resolvable:$true] %s7
  %10 = dma.hbm_to_smem %s8, 16, [#allocation3], [#allocation2]
  %12 = dma.done [#allocation2], 16
  %13 = sfence
  $region1: #{tpu_custom_call.1} parent=0
    #allocation4 [shape = 'u8[24576]{0}', space=vmem, size = 0x6000, scoped, tag = 'output window, operand 0, single buffered']
    #allocation5 [shape = 's32[1]{0}', space=sflag, size = 0x4, scoped, tag = 'scoped memory for tpu_custom_call.1']
    %14 = vsyncpa [#allocation5], 0
    %v15 = vlaneseq
    %v16 = vshrl.u32 %v15, 7
    %v17 = vlaneseq
    %v18 = vand.u32 %v17, 127
    %s19 = smul.u32 0, 1024
    %v20 = vmul.u32 %v16, 128
    %v21 = vstv %s19
    %v22 = vadd.s32 %v21, %v20
    %v23 = vadd.s32 %v22, %v18
    %v24 = vshra.s32 %v23, 6
    %v25 = vmul.u32 %v24, 64
    %v26 = vsub.s32 %v23, %v25
    %v27 = vshra.s32 %v26, 3
    %v28 = vmul.u32 %v27, 8
    %v29 = vsub.s32 %v26, %v28
    %v30 = vcvt.s32.f32 %v24
    %v31 = vmul.f32 %v30, 0.25
    %v32 = vsub.f32 %v31, 1.0
    %v33 = vcvt.s32.f32 %v27
    %v34 = vmul.f32 %v33, 0.25
    %v35 = vsub.f32 %v34, 1.0
    %v36 = vcvt.s32.f32 %v29
    %v37 = vmul.f32 %v36, 0.25
    %v38 = vsub.f32 %v37, 1.0
    %s39 = smul.u32 0, 24
    %s40 = sld [smem:[#allocation3 + %s39]]
    %s41 = sadd.s32 %s39, 1
    %s42 = sld [smem:[#allocation3 + %s41]]
    %s43 = sadd.s32 %s39, 2
    %s44 = sld [smem:[#allocation3 + %s43]]
    %s45 = sadd.s32 %s39, 3
    %s46 = sld [smem:[#allocation3 + %s45]]
    %v47 = vstv %s40
    %v48 = vmul.f32 %v47, %v32
    %v49 = vstv %s42
    %v50 = vmul.f32 %v49, %v35
    %v51 = vadd.f32 %v48, %v50
    %v52 = vstv %s44
    %v53 = vmul.f32 %v52, %v38
    %v54 = vadd.f32 %v51, %v53
    %v55 = vstv %s46
    %v56 = vadd.f32 %v54, %v55
    %57 = vst [vmem:[#allocation4] sm:$0xff] %v56
    %s58 = sadd.s32 %s39, 4
    %s59 = sld [smem:[#allocation3 + %s58]]
    %s60 = sadd.s32 %s39, 5
    %s61 = sld [smem:[#allocation3 + %s60]]
    %s62 = sadd.s32 %s39, 6
    %s63 = sld [smem:[#allocation3 + %s62]]
    %s64 = sadd.s32 %s39, 7
    %s65 = sld [smem:[#allocation3 + %s64]]
    %v66 = vstv %s59
    %v67 = vmul.f32 %v66, %v32
    %v68 = vstv %s61
    %v69 = vmul.f32 %v68, %v35
    %v70 = vadd.f32 %v67, %v69
    %v71 = vstv %s63
    %v72 = vmul.f32 %v71, %v38
    %v73 = vadd.f32 %v70, %v72
    %v74 = vstv %s65
    %v75 = vadd.f32 %v73, %v74
    %s76 = scalar_lea.vmem [#allocation4], 8
    %77 = vst [vmem:[%s76] sm:$0xff] %v75
    %s78 = sadd.s32 %s39, 8
    %s79 = sld [smem:[#allocation3 + %s78]]
    %s80 = sadd.s32 %s39, 9
    %s81 = sld [smem:[#allocation3 + %s80]]
    %s82 = sadd.s32 %s39, 10
    %s83 = sld [smem:[#allocation3 + %s82]]
    %s84 = sadd.s32 %s39, 11
    %s85 = sld [smem:[#allocation3 + %s84]]
    %v86 = vstv %s79
    %v87 = vmul.f32 %v86, %v32
    %v88 = vstv %s81
    %v89 = vmul.f32 %v88, %v35
    %v90 = vadd.f32 %v87, %v89
    %v91 = vstv %s83
    %v92 = vmul.f32 %v91, %v38
    %v93 = vadd.f32 %v90, %v92
    %v94 = vstv %s85
    %v95 = vadd.f32 %v93, %v94
    %s96 = scalar_lea.vmem [#allocation4], 16
    %97 = vst [vmem:[%s96] sm:$0xff] %v95
    %s98 = smul.u32 0, 2
    %s99 = sadd.s32 %s98, 1
    %s100 = smul.u32 %s99, 12
    %s101 = sld [smem:[#allocation3 + %s100]]
    %s102 = sadd.s32 %s100, 1
    %s103 = sld [smem:[#allocation3 + %s102]]
    %s104 = sadd.s32 %s100, 2
    %s105 = sld [smem:[#allocation3 + %s104]]
    %s106 = sadd.s32 %s100, 3
    %s107 = sld [smem:[#allocation3 + %s106]]
    %v108 = vstv %s101
    %v109 = vmul.f32 %v108, %v32
    %v110 = vstv %s103
    %v111 = vmul.f32 %v110, %v35
    %v112 = vadd.f32 %v109, %v111
    %v113 = vstv %s105
    %v114 = vmul.f32 %v113, %v38
    %v115 = vadd.f32 %v112, %v114
    %v116 = vstv %s107
    %v117 = vadd.f32 %v115, %v116
    %s118 = scalar_lea.vmem [#allocation4], 24
    %119 = vst [vmem:[%s118] sm:$0xff] %v117
    %s120 = sadd.s32 %s100, 4
    %s121 = sld [smem:[#allocation3 + %s120]]
    %s122 = sadd.s32 %s100, 5
    %s123 = sld [smem:[#allocation3 + %s122]]
    %s124 = sadd.s32 %s100, 6
    %s125 = sld [smem:[#allocation3 + %s124]]
    %s126 = sadd.s32 %s100, 7
    %s127 = sld [smem:[#allocation3 + %s126]]
    %v128 = vstv %s121
    %v129 = vmul.f32 %v128, %v32
    %v130 = vstv %s123
    %v131 = vmul.f32 %v130, %v35
    %v132 = vadd.f32 %v129, %v131
    %v133 = vstv %s125
    %v134 = vmul.f32 %v133, %v38
    %v135 = vadd.f32 %v132, %v134
    %v136 = vstv %s127
    %v137 = vadd.f32 %v135, %v136
    %s138 = scalar_lea.vmem [#allocation4], 32
    %139 = vst [vmem:[%s138] sm:$0xff] %v137
    %s140 = sadd.s32 %s100, 8
    %s141 = sld [smem:[#allocation3 + %s140]]
    %s142 = sadd.s32 %s100, 9
    %s143 = sld [smem:[#allocation3 + %s142]]
    %s144 = sadd.s32 %s100, 10
    %s145 = sld [smem:[#allocation3 + %s144]]
    %s146 = sadd.s32 %s100, 11
    %s147 = sld [smem:[#allocation3 + %s146]]
    %v148 = vstv %s141
    %v149 = vmul.f32 %v148, %v32
    %v150 = vstv %s143
    %v151 = vmul.f32 %v150, %v35
    %v152 = vadd.f32 %v149, %v151
    %v153 = vstv %s145
    %v154 = vmul.f32 %v153, %v38
    %v155 = vadd.f32 %v152, %v154
    %v156 = vstv %s147
    %v157 = vadd.f32 %v155, %v156
    %s158 = scalar_lea.vmem [#allocation4], 40
    %159 = vst [vmem:[%s158] sm:$0xff] %v157
    // Predicated region
    $region2: #{tpu_custom_call.1} parent=1 // pred_check
      _
    $region3: #{tpu_custom_call.1} parent=1 // pred_check_branch
      %161 = sbr.rel (0) target = $region5
    $region4: #{tpu_custom_call.1} parent=1 // pred_region
      %163 = vsyncadd [#allocation5], 0
      %s164 = sshll.u32 [#allocation4], 4
      %s165 = int_to_ptr.vmem [resolvable:$true] %s164
      %s166 = sshll.u32 %s1, 4
      %s167 = int_to_ptr.hbm [resolvable:$true] %s166
      %172 = dma.vmem_to_hbm [thread:$0]  %s165, 768, %s167, [#allocation5], 128, 128, 8
    $region5: #{tpu_custom_call.1} parent=1 // pred_fallthru
      _
    // Predicated region
    $region6: #{tpu_custom_call.1} parent=1 // pred_check
      _
    $region7: #{tpu_custom_call.1} parent=1 // pred_check_branch
      %174 = sbr.rel (0) target = $region9
    $region8: #{tpu_custom_call.1} parent=1 // pred_region
      %176 = dma.done [#allocation5], 768
    $region9: #{tpu_custom_call.1} parent=1 // pred_fallthru
      _
    %177 = vsyncpa [#allocation5], 1

</llo_original>
